<compile_context>
chip_gen: v6e
topology: v6e:2x2x1
jax: 0.10.0
libtpu: 0.0.40
codegen_flags: <defaults>
</compile_context>

<pallas_src>
import jax
import jax.numpy as jnp
from jax import lax
from jax.experimental import pallas as pl
from jax.experimental.pallas import tpu as pltpu


def _round_up(x, m):
    return ((x + m - 1) // m) * m


# Vocabularies up to this size use the MXU one-hot matmul path.
_ONE_HOT_MAX_VOCAB = 2048
# Target lane-dense output block size per grid step (~0.5 MiB).
_TARGET_OUT_BLOCK_BYTES = 512 * 1024
# Cap on the (t_blk, vocab) one-hot intermediate.
_ONE_HOT_MAX_BYTES = 4 * 1024 * 1024
# Hard cap on tokens per block.
_MAX_BLOCK_TOKENS = 4096
# Fraction of (per-TensorCore) VMEM a resident table may occupy.
_RESIDENT_VMEM_FRACTION = 0.6


def _vmem_capacity_bytes():
    """Per-TensorCore VMEM capacity, generation-aware with a safe fallback."""
    try:
        return int(pltpu.get_tpu_info().vmem_capacity_bytes)
    except Exception:
        return 64 * 1024 * 1024  # conservative: v7x per-TC VMEM


# ---------------------------------------------------------------------------
# Path A: small vocab -> MXU one-hot matmul, table resident in VMEM (1 copy).
# ---------------------------------------------------------------------------
def _one_hot_kernel(ids_ref, table_ref, out_ref):
    # ids_ref   : VMEM (t_blk, 1) int32 block
    # table_ref : VMEM (vocab, d) full table (unblocked, single copy)
    # out_ref   : VMEM (t_blk, d) output block
    t_blk = out_ref.shape[0]
    vocab = table_ref.shape[0]
    ids_col = ids_ref[...]                                     # (t_blk, 1)
    iota = lax.broadcasted_iota(jnp.int32, (t_blk, vocab), 1)  # (t_blk, vocab)
    one_hot = (ids_col == iota).astype(table_ref.dtype)
    acc = jnp.dot(one_hot, table_ref[...], preferred_element_type=jnp.float32)
    out_ref[...] = acc.astype(out_ref.dtype)


# ---------------------------------------------------------------------------
# Path B: mid-size vocab -> table resident in VMEM, dynamic row gather.
# ---------------------------------------------------------------------------
def _resident_gather_kernel(ids_sm, table_ref, out_ref):
    # ids_sm    : SMEM (n_pad,) int32 (scalar prefetch)
    # table_ref : VMEM (vocab, d) full table (unblocked, single copy)
    # out_ref   : VMEM (t_blk, d)
    t_blk = out_ref.shape[0]
    base = pl.program_id(0) * t_blk

    def body(t, carry):
        idx = ids_sm[base + t]
        out_ref[pl.ds(t, 1), :] = table_ref[pl.ds(idx, 1), :]
        return carry

    # Unrolled so loads/stores/scalar address math of neighboring tokens
    # co-issue instead of forming one long dependent chain.
    lax.fori_loop(0, t_blk, body, 0, unroll=8)


# ---------------------------------------------------------------------------
# Path C: large vocab -> table in HBM, double-buffered manual row DMAs.
# ---------------------------------------------------------------------------
def _hbm_gather_kernel(ids_sm, table_hbm, out_ref, buf_ref, sem_ref):
    # ids_sm    : SMEM (n_pad,) int32 (scalar prefetch)
    # table_hbm : HBM/ANY (vocab, d) raw ref (no auto-DMA)
    # out_ref   : VMEM (t_blk, d)
    # buf_ref   : VMEM (2, t_blk, d) double buffer
    # sem_ref   : DMA semaphores, shape (2,) (one per slot)
    t_blk = out_ref.shape[0]
    i = pl.program_id(0)
    nb = pl.num_programs(0)
    slot = i % 2

    def issue(block_idx, s):
        base = block_idx * t_blk

        def body(t, carry):
            idx = ids_sm[base + t]
            pltpu.make_async_copy(
                table_hbm.at[pl.ds(idx, 1), :],
                buf_ref.at[s, pl.ds(t, 1), :],
                sem_ref.at[s],
            ).start()
            return carry

        lax.fori_loop(0, t_blk, body, 0, unroll=8)

    # Prologue: prime slot 0 with block 0's rows.
    @pl.when(i == 0)
    def _():
        issue(0, 0)

    # Wait for all rows of the current block. The wait amount depends only on
    # the copy shape, so use static-index descriptors (no SMEM reads / dynamic
    # address math in the wait loop).
    def wait_body(t, carry):
        pltpu.make_async_copy(
            table_hbm.at[pl.ds(0, 1), :],
            buf_ref.at[slot, pl.ds(0, 1), :],
            sem_ref.at[slot],
        ).wait()
        return carry

    lax.fori_loop(0, t_blk, wait_body, 0, unroll=8)

    # Prefetch block i+1's rows into the other slot; these DMAs overlap with
    # the VMEM copy below and with the pipeline's HBM writeback of out_ref.
    @pl.when(i + 1 < nb)
    def _():
        issue(i + 1, 1 - slot)

    out_ref[...] = buf_ref[slot]


# ---------------------------------------------------------------------------
# Wrapper
# ---------------------------------------------------------------------------
def embedding_forward(ids, table, *, block_tokens=None, mode="auto"):
    """Gather `table[ids]` (torch.nn.Embedding forward).

    ids   : integer array, any shape (e.g. (batch, seq)).
    table : (vocab_size, embed_dim) float array.
    mode  : "auto" | "one_hot" | "resident" | "hbm".
    Returns array of shape ids.shape + (embed_dim,), dtype = table.dtype.
    """
    batch_shape = ids.shape
    vocab, d = table.shape
    itemsize = jnp.dtype(table.dtype).itemsize
    table_bytes = vocab * d * itemsize

    flat_ids = ids.reshape(-1).astype(jnp.int32)
    n = flat_ids.shape[0]

    vmem_cap = _vmem_capacity_bytes()

    if mode == "auto":
        fits_vmem = table_bytes <= int(_RESIDENT_VMEM_FRACTION * vmem_cap)
        if fits_vmem and vocab <= _ONE_HOT_MAX_VOCAB:
            mode = "one_hot"
        elif fits_vmem:
            mode = "resident"
        else:
            mode = "hbm"

    # Token block: lane-dense (t_blk, d) output block, ~512 KiB target so the
    # fixed per-grid-step overhead is amortized; multiple of 8 sublanes.
    if block_tokens is None:
        t_blk = max(8, _TARGET_OUT_BLOCK_BYTES // max(1, d * itemsize))
        if mode == "one_hot":
            # Keep the (t_blk, vocab) one-hot intermediate modest.
            t_blk = min(t_blk, max(8, _ONE_HOT_MAX_BYTES // max(1, vocab * itemsize)))
        t_blk = min(t_blk, _MAX_BLOCK_TOKENS)
    else:
        t_blk = block_tokens
    t_blk = _round_up(min(t_blk, _round_up(n, 8)), 8)

    n_pad = _round_up(n, t_blk)
    if n_pad != n:
        flat_ids = jnp.pad(flat_ids, (0, n_pad - n))  # id 0 is always valid
    num_blocks = n_pad // t_blk
    out_block_bytes = t_blk * d * itemsize

    # VMEM budget (per TensorCore). Always set explicitly: v5e's default
    # scoped limit is only 16 MiB and would otherwise reject mid-size
    # resident tables.
    if mode == "one_hot":
        needed = table_bytes + 2 * out_block_bytes + t_blk * vocab * itemsize
    elif mode == "resident":
        needed = table_bytes + 2 * out_block_bytes
    else:  # hbm: (2, t_blk, d) scratch + 2x pipelined output blocks
        needed = 4 * out_block_bytes
    vmem_limit = int(min(max(needed + (8 << 20), 32 << 20), vmem_cap))

    cost = pl.CostEstimate(
        flops=2 * n_pad * vocab * d if mode == "one_hot" else 0,
        transcendentals=0,
        bytes_accessed=int(
            n_pad * d * itemsize                 # output write
            + 4 * n_pad                          # ids
            + (table_bytes if mode != "hbm" else n_pad * d * itemsize)),
    )

    out_shape = jax.ShapeDtypeStruct((n_pad, d), table.dtype)

    if mode == "one_hot":
        grid_spec = pltpu.PrefetchScalarGridSpec(
            num_scalar_prefetch=0,
            grid=(num_blocks,),
            in_specs=[
                pl.BlockSpec((t_blk, 1), lambda i: (i, 0)),        # ids block
                # Unblocked VMEM operand: one HBM->VMEM copy, single-buffered,
                # resident for the whole grid.
                pl.BlockSpec(memory_space=pltpu.MemorySpace.VMEM),  # table
            ],
            out_specs=pl.BlockSpec((t_blk, d), lambda i: (i, 0)),
        )
        out = pl.pallas_call(
            _one_hot_kernel,
            out_shape=out_shape,
            grid_spec=grid_spec,
            compiler_params=pltpu.CompilerParams(
                dimension_semantics=("parallel",),
                vmem_limit_bytes=vmem_limit,
            ),
            cost_estimate=cost,
        )(flat_ids.reshape(n_pad, 1), table)

    elif mode == "resident":
        # TODO(synk): for very long sequences (>~64K tokens) the scalar-prefetched
        # ids may exceed SMEM; switch to per-block SMEM id blocks then.
        grid_spec = pltpu.PrefetchScalarGridSpec(
            num_scalar_prefetch=1,                                  # ids -> SMEM
            grid=(num_blocks,),
            in_specs=[
                pl.BlockSpec(memory_space=pltpu.MemorySpace.VMEM),  # table resident
            ],
            out_specs=pl.BlockSpec((t_blk, d), lambda i, ids_sm: (i, 0)),
        )
        out = pl.pallas_call(
            _resident_gather_kernel,
            out_shape=out_shape,
            grid_spec=grid_spec,
            compiler_params=pltpu.CompilerParams(
                dimension_semantics=("parallel",),
                vmem_limit_bytes=vmem_limit,
            ),
            cost_estimate=cost,
        )(flat_ids, table)

    else:  # mode == "hbm"
        grid_spec = pltpu.PrefetchScalarGridSpec(
            num_scalar_prefetch=1,                                  # ids -> SMEM
            grid=(num_blocks,),
            in_specs=[
                pl.BlockSpec(memory_space=pl.ANY),                  # table in HBM
            ],
            out_specs=pl.BlockSpec((t_blk, d), lambda i, ids_sm: (i, 0)),
            scratch_shapes=[
                pltpu.VMEM((2, t_blk, d), table.dtype),             # double buffer
                pltpu.SemaphoreType.DMA((2,)),                      # one sem/slot
            ],
        )
        out = pl.pallas_call(
            _hbm_gather_kernel,
            out_shape=out_shape,
            grid_spec=grid_spec,
            compiler_params=pltpu.CompilerParams(
                # Sequential: the cross-step scratch prefetch carries state.
                dimension_semantics=("arbitrary",),
                vmem_limit_bytes=vmem_limit,
            ),
            cost_estimate=cost,
        )(flat_ids, table)

    if n_pad != n:
        out = out[:n]
    return out.reshape(*batch_shape, d)


if __name__ == "__main__":
    key = jax.random.PRNGKey(0)
    vocab_size, embed_dim = 32, 128
    batch, seq = 2, 8

    kw, kx = jax.random.split(key)
    # nn.Embedding default init is N(0, 1)
    table = jax.random.normal(kw, (vocab_size, embed_dim), dtype=jnp.float32)
    ids = jax.random.randint(kx, (batch, seq), 0, vocab_size, dtype=jnp.int32)

    ref = table[ids]

    # Default (auto) path: MXU one-hot matmul with a VMEM-resident table.
    out = jax.block_until_ready(embedding_forward(ids, table))
    assert out.shape == (batch, seq, embed_dim), out.shape
    assert out.dtype == table.dtype
    assert jnp.allclose(out, ref), "embedding mismatch (one-hot MXU path)"

    # VMEM-resident dynamic-row-gather path (mid-size vocab).
    out_res = jax.block_until_ready(embedding_forward(ids, table, mode="resident"))
    assert jnp.allclose(out_res, ref), "embedding mismatch (resident gather path)"

    # Large-vocab path: double-buffered manual row DMAs from HBM.
    out_hbm = jax.block_until_ready(embedding_forward(ids, table, mode="hbm"))
    assert jnp.allclose(out_hbm, ref), "embedding mismatch (HBM gather path)"

    print("KERNEL_OK")
</pallas_src>

<mosaic_0001>
module attributes {stable_mosaic.version = 11 : i64} {
  func.func @_one_hot_kernel(%arg0: i32, %arg1: memref<16x1xi32, #tpu.memory_space<vmem>>, %arg2: memref<32x128xf32, #tpu.memory_space<vmem>>, %arg3: memref<16x128xf32, #tpu.memory_space<vmem>>) attributes {dimension_semantics = [#tpu.dimension_semantics<parallel>], iteration_bounds = array<i64: 1>, scalar_prefetch = 0 : i64, scratch_operands = 0 : i64, tpu.core_type = #tpu.core_type<tc>, window_params = [{transform_indices = @transform_0, window_bounds = array<i64: 16, 1>}, {pipeline_mode = #tpu.pipeline_mode<synchronous>, transform_indices = @transform_1, window_bounds = array<i64: 32, 128>}, {transform_indices = @transform_2, window_bounds = array<i64: 16, 128>}]} {
    %c0 = arith.constant 0 : index
    %c0_0 = arith.constant 0 : index
    %0 = vector.load %arg1[%c0, %c0_0] : memref<16x1xi32, #tpu.memory_space<vmem>>, vector<16x1xi32>
    %1 = tpu.iota {dimensions = array<i32: 1>} : vector<16x32xi32>
    %2 = vector.broadcast %0 : vector<16x1xi32> to vector<16x32xi32>
    %3 = arith.cmpi eq, %2, %1 : vector<16x32xi32>
    %4 = arith.extui %3 : vector<16x32xi1> to vector<16x32xi32>
    %5 = arith.sitofp %4 : vector<16x32xi32> to vector<16x32xf32>
    %c0_1 = arith.constant 0 : index
    %c0_2 = arith.constant 0 : index
    %6 = vector.load %arg2[%c0_1, %c0_2] : memref<32x128xf32, #tpu.memory_space<vmem>>, vector<32x128xf32>
    %cst = arith.constant dense<0.000000e+00> : vector<16x128xf32>
    %7 = tpu.matmul %5, %6, %cst {dimension_numbers = #tpu.dot_dimension_numbers<[1], [0], [0], [1], [0, 0, 1, 1], [], []>} : vector<16x32xf32>, vector<32x128xf32>, vector<16x128xf32> -> vector<16x128xf32>
    %c0_3 = arith.constant 0 : index
    %c0_4 = arith.constant 0 : index
    %8 = vector.load %arg3[%c0_3, %c0_4] : memref<16x128xf32, #tpu.memory_space<vmem>>, vector<16x128xf32>
    tpu.vector_store %arg3[%c0_3, %c0_4], %7 {strides = array<i32>} : memref<16x128xf32, #tpu.memory_space<vmem>>, vector<16x128xf32>,
    return
  }
  func.func @transform_0(%arg0: i32) -> (i32, i32) {
    %c0_i32 = arith.constant 0 : i32
    %c0_i32_0 = arith.constant 0 : i32
    return %arg0, %c0_i32 : i32, i32
  }
  func.func @transform_1(%arg0: i32) -> (i32, i32) {
    %c0_i32 = arith.constant 0 : i32
    %c0_i32_0 = arith.constant 0 : i32
    %c0_i32_1 = arith.constant 0 : i32
    return %c0_i32, %c0_i32_0 : i32, i32
  }
  func.func @transform_2(%arg0: i32) -> (i32, i32) {
    %c0_i32 = arith.constant 0 : i32
    %c0_i32_0 = arith.constant 0 : i32
    return %arg0, %c0_i32 : i32, i32
  }
}

</mosaic_0001>

<llo_original>
// kernel: tpu_custom_call.1
$region0: #{tpu_custom_call.1}
  #allocation0 [shape = 'u32[]', space=smem, size = 0x4, offset = 0x4, fixed_abs, tag = 'smem constant byte address 0x4 - core index']
  #allocation1 [shape = 'u32[144,128]{1,0:T(1,128)}', space=vmem, size = 0x12000, scoped, tag = 'internal scratch']
  %s0 = inlined_call_operand.vmem [shape: s32[16,1], index: 0, kind: input, shape index: {}]
  %s1 = inlined_call_operand.hbm [shape: f32[32,128], index: 1, kind: input, shape index: {}]
  %s2 = inlined_call_operand.hbm [shape: f32[16,128], index: 2, kind: output, shape index: {}]
  %s3 = sld [smem:[#allocation0]]
  $region22: #{tpu_custom_call.1} parent=0
    _
  %s5 = ssub.s32 1, %s3
  %s6 = scalar_select 0, %s5, %s3
  $region1: #{tpu_custom_call.1} parent=0
    #allocation2 [shape = 'u8[16384]{0}', space=vmem, size = 0x4000, scoped, tag = 'input window, operand 1, single buffered']
    #allocation3 [shape = 's32[1]{0}', space=sflag, size = 0x4, scoped, tag = 'scoped memory for tpu_custom_call.1']
    #allocation4 [shape = 's32[1]{0}', space=sflag, size = 0x4, scoped, tag = 'scoped memory for tpu_custom_call.1']
    #allocation5 [shape = 'u8[8192]{0}', space=vmem, size = 0x2000, scoped, tag = 'output window, operand 0, single buffered']
    %7 = vsyncpa [#allocation3], 0
    %8 = vsyncpa [#allocation4], 0
    // Predicated region
    $region2: #{tpu_custom_call.1} parent=1 // pred_check
      _
    $region3: #{tpu_custom_call.1} parent=1 // pred_check_branch
      %10 = sbr.rel (0) target = $region5
    $region4: #{tpu_custom_call.1} parent=1 // pred_region
      _
    $region5: #{tpu_custom_call.1} parent=1 // pred_fallthru
      _
    // Predicated region
    $region6: #{tpu_custom_call.1} parent=1 // pred_check
      _
    $region7: #{tpu_custom_call.1} parent=1 // pred_check_branch
      %12 = sbr.rel (0) target = $region9
    $region8: #{tpu_custom_call.1} parent=1 // pred_region
      %s14 = ssub.s32 512, 512
      %15 = vsyncadd [#allocation3], %s14
      %s16 = sshll.u32 [#allocation2], 4
      %s17 = int_to_ptr.vmem [resolvable:$true] %s16
      %22 = dma.hbm_to_vmem [thread:$0]  %s1, 512, %s17, [#allocation3], 128, 128, 8
    $region9: #{tpu_custom_call.1} parent=1 // pred_fallthru
      _
    // Predicated region
    $region10: #{tpu_custom_call.1} parent=1 // pred_check
      _
    $region11: #{tpu_custom_call.1} parent=1 // pred_check_branch
      %24 = sbr.rel (0) target = $region13
    $region12: #{tpu_custom_call.1} parent=1 // pred_region
      %25 = dma.done [#allocation3], 512
    $region13: #{tpu_custom_call.1} parent=1 // pred_fallthru
      _
    %v26 = vld [vmem:[%s0] sm:$0xff]
    %v27 = vld [vmem:[%s0 + $0x8] sm:$0xff]
    %v28 = vlaneseq
    %v29 = vand.u32 %v28, 127
    %30 = vset.pattern.permute.xlu0 0
    %31 = vperm.xlu0 %30, %v26
    %v32 = vpop.permute.xlu0 %31
    %33 = vset.pattern.permute.xlu0 0
    %34 = vperm.xlu0 %33, %v27
    %v35 = vpop.permute.xlu0 %34
    %vm36 = vcmp.eq.s32.totalorder %v32, %v29
    %vm37 = vcmp.eq.s32.totalorder %v35, %v29
    %v38 = vsel %vm36, 1, 0
    %v39 = vsel %vm37, 1, 0
    %v40 = vcvt.s32.f32 %v38
    %v41 = vcvt.s32.f32 %v39
    %v42 = vld [vmem:[#allocation2] sm:$0xff]
    %v43 = vld [vmem:[#allocation2 + $0x8] sm:$0xff]
    %v44 = vld [vmem:[#allocation2 + $0x10] sm:$0xff]
    %v45 = vld [vmem:[#allocation2 + $0x18] sm:$0xff]
    %vm46 = vcmask 261120
    %v48 = vsel %vm46, %v40, 0
    %v51 = vsel %vm46, %v41, 0
    %53 = vmatprep.subr.mxu0 0.0
    %54 = vmatpush1.msra.mxu0 0.0
    %55 = vmatprep.subr.mxu0 0.0
    %56 = vmatpush1.msra.mxu0 0.0
    %57 = vmatprep.subr.mxu0 0.0
    %58 = vmatpush1.msra.mxu0 0.0
    %59 = vmatprep.subr.mxu0 0.0
    %60 = vmatpush1.msra.mxu0 0.0
    %61 = vmatprep.subr.mxu0 0.0
    %62 = vmatpush1.msra.mxu0 0.0
    %63 = vmatprep.subr.mxu0 0.0
    %64 = vmatpush1.msra.mxu0 0.0
    %65 = vmatprep.subr.mxu0 0.0
    %66 = vmatpush1.msra.mxu0 0.0
    %67 = vmatprep.subr.mxu0 0.0
    %68 = vmatpush1.msra.mxu0 0.0
    %69 = vmatprep.subr.mxu0 0.0
    %70 = vmatpush1.msra.mxu0 0.0
    %71 = vmatprep.subr.mxu0 0.0
    %72 = vmatpush1.msra.mxu0 0.0
    %73 = vmatprep.subr.mxu0 0.0
    %74 = vmatpush1.msra.mxu0 0.0
    %75 = vmatprep.subr.mxu0 0.0
    %76 = vmatpush1.msra.mxu0 0.0
    %77 = vmatprep.subr.mxu0 0.0
    %78 = vmatpush1.msra.mxu0 %v45
    %79 = vmatprep.subr.mxu0 0.0
    %80 = vmatpush1.msra.mxu0 %v44
    %81 = vmatprep.subr.mxu0 0.0
    %82 = vmatpush1.msra.mxu0 %v43
    %83 = vmatprep.subr.mxu0 0.0
    %84 = vmatpush1.msra.mxu0 %v42
    %85 = vmatprep.subr.mxu0 0.0
    %86 = vmatpush2.msra.mxu0 0.0
    %87 = vmatprep.subr.mxu0 0.0
    %88 = vmatpush2.msra.mxu0 0.0
    %89 = vmatprep.subr.mxu0 0.0
    %90 = vmatpush2.msra.mxu0 0.0
    %91 = vmatprep.subr.mxu0 0.0
    %92 = vmatpush2.msra.mxu0 0.0
    %93 = vmatprep.subr.mxu0 0.0
    %94 = vmatpush2.msra.mxu0 0.0
    %95 = vmatprep.subr.mxu0 0.0
    %96 = vmatpush2.msra.mxu0 0.0
    %97 = vmatprep.subr.mxu0 0.0
    %98 = vmatpush2.msra.mxu0 0.0
    %99 = vmatprep.subr.mxu0 0.0
    %100 = vmatpush2.msra.mxu0 0.0
    %101 = vmatprep.subr.mxu0 0.0
    %102 = vmatpush2.msra.mxu0 0.0
    %103 = vmatprep.subr.mxu0 0.0
    %104 = vmatpush2.msra.mxu0 0.0
    %105 = vmatprep.subr.mxu0 0.0
    %106 = vmatpush2.msra.mxu0 0.0
    %107 = vmatprep.subr.mxu0 0.0
    %108 = vmatpush2.msra.mxu0 0.0
    %109 = vmatprep.subr.mxu0 0.0
    %110 = vmatpush2.msra.mxu0 0.0
    %111 = vmatprep.subr.mxu0 0.0
    %112 = vmatpush2.msra.mxu0 0.0
    %113 = vmatprep.subr.mxu0 0.0
    %114 = vmatpush2.msra.mxu0 0.0
    %115 = vmatprep.subr.mxu0 0.0
    %116 = vmatpush2.msra.mxu0 0.0
    %117 = vmatprep.mubr.f32.mxu0 0.0
    %118 = vmatmul.mubr.f32.gmra.mxu0 %v48
    %v119 = vpop.f32.mrf.mxu0
    %v120 = vadd.f32 0.0, %v119
    %v121 = vpop.f32.mrf.mxu0
    %122 = vmatprep.mubr.f32.mxu0 0.0
    %123 = vmatmul.mubr.f32.gmra.mxu0 %v51
    %v124 = vpop.f32.mrf.mxu0
    %v125 = vadd.f32 0.0, %v124
    %v126 = vpop.f32.mrf.mxu0
    %127 = vdwg.mxu0
    %128 = vst [vmem:[#allocation5] sm:$0xff] %v120
    %129 = vst [vmem:[#allocation5 + $0x8] sm:$0xff] %v125
    // Predicated region
    $region14: #{tpu_custom_call.1} parent=1 // pred_check
      _
    $region15: #{tpu_custom_call.1} parent=1 // pred_check_branch
      %131 = sbr.rel (0) target = $region17
    $region16: #{tpu_custom_call.1} parent=1 // pred_region
      %s133 = ssub.s32 256, 256
      %134 = vsyncadd [#allocation4], %s133
      %s135 = sshll.u32 [#allocation5], 4
      %s136 = int_to_ptr.vmem [resolvable:$true] %s135
      %141 = dma.vmem_to_hbm [thread:$0]  %s136, 256, %s2, [#allocation4], 128, 128, 8
    $region17: #{tpu_custom_call.1} parent=1 // pred_fallthru
      _
    // Predicated region
    $region18: #{tpu_custom_call.1} parent=1 // pred_check
      _
    $region19: #{tpu_custom_call.1} parent=1 // pred_check_branch
      %143 = sbr.rel (0) target = $region21
    $region20: #{tpu_custom_call.1} parent=1 // pred_region
      %144 = dma.done [#allocation4], 256
    $region21: #{tpu_custom_call.1} parent=1 // pred_fallthru
      _
    %145 = vsyncpa [#allocation3], 1
    %146 = vsyncpa [#allocation4], 1

</llo_original>
